<compile_context>
chip_gen: v7x
topology: tpu7x:2x2x1
jax: 0.10.0
libtpu: 0.0.40
codegen_flags: <defaults>
</compile_context>

<pallas_src>
import jax
import jax.numpy as jnp
from jax.experimental import pallas as pl
from jax.experimental.pallas import tpu as pltpu

_EPS = 1e-5
_VMEM_BUDGET = 48 << 20        # stays under v7x's 64 MiB physical VMEM per TC


def _round_up(n, m):
    return ((n + m - 1) // m) * m


# ---------------------------------------------------------------------------
# Kernel
# ---------------------------------------------------------------------------
def _cgr_kernel(xg_ref, xbf_ref, x1_ref, wT_ref, p_ref, o_ref):
    tn = o_ref.shape[-1]
    col0 = pl.multiple_of(pl.program_id(0) * tn, 128)   # 128-aligned gate offset

    # fc (bias-free; see note above).  bf16 operands on the MXU, f32 accumulate.
    x2 = jnp.dot(xbf_ref[...], wT_ref[...], preferred_element_type=jnp.float32)

    x1 = x1_ref[...].astype(jnp.float32)

    def _center_var(v):
        mu = jnp.mean(v, axis=0, keepdims=True)          # sublane reduce (XLU)
        d = v - mu                                       # reused for var + norm
        var = jnp.mean(d * d, axis=0, keepdims=True)     # biased variance
        return d, var

    d1, var1 = _center_var(x1)
    d2, var2 = _center_var(x2)

    # Fused BN affines: t = d1*s1 + d2*s2 + (beta1 + beta2).  rsqrt -> EUP slot.
    s1 = p_ref[0:1, :] * jax.lax.rsqrt(var1 + _EPS)
    s2 = p_ref[1:2, :] * jax.lax.rsqrt(var2 + _EPS)
    t = d1 * s1 + d2 * s2 + p_ref[2:3, :]

    # GLU(cat([x, t], 1), 1) == x * sigmoid(t); gate sliced from the resident
    # full-x block (x read from HBM once, f32-exact gating).
    xg = xg_ref[:, pl.ds(col0, tn)]
    o_ref[...] = (xg * jax.nn.sigmoid(t)).astype(o_ref.dtype)


# ---------------------------------------------------------------------------
# Tiling / VMEM accounting
# ---------------------------------------------------------------------------
def _working_set_bytes(B, D, tn):
    resident = B * D * 4 + B * D * 2          # f32 x (gate) + bf16 x (matmul LHS)
    streamed = 2 * (B * tn * 4                # x1 tile (double-buffered)
                    + D * tn * 2              # wT tile (bf16)
                    + 8 * tn * 4              # packed BN params
                    + B * tn * 4)             # output tile
    temps = 5 * B * tn * 4                    # x2, d1, d2, t, sigmoid temporaries
    return resident + streamed + temps


def _pick_tile(B, D):
    """Largest lane-dense divisor of (padded) D fitting the VMEM budget,
    preferring >=2 grid steps so v7x's two TensorCores both get work."""
    cands = [tn for tn in (2048, 1536, 1024, 768, 512, 384, 256, 128) if D % tn == 0]
    if not cands:
        return D
    multi = [tn for tn in cands if D // tn >= 2]
    order = multi or cands
    for tn in order:
        if _working_set_bytes(B, D, tn) + (4 << 20) <= _VMEM_BUDGET:
            return tn
    return order[-1]


def _vmem_limit_bytes(B, D, tn):
    need = _working_set_bytes(B, D, tn) + (4 << 20)     # >=4 MiB headroom
    return int(min(max(need, 32 << 20), _VMEM_BUDGET))


# ---------------------------------------------------------------------------
# One-time parameter prep
# ---------------------------------------------------------------------------
def prepare_params(w, b, g1, be1, g2, be2):
    """Transpose + bf16-cast the weight, pad D to a multiple of 128, and pack
    the per-feature BN params into one (8, D_pad) array:
      row 0 = gamma1, row 1 = gamma2, row 2 = beta1 + beta2, rows 3..7 = 0.
    The Linear bias is intentionally dropped (cancelled by training-mode BN2's
    batch-mean subtraction)."""
    del b
    D = w.shape[0]
    Dp = _round_up(D, 128)

    wT = jnp.zeros((Dp, Dp), dtype=jnp.bfloat16)
    wT = wT.at[:D, :D].set(jnp.asarray(w.T, dtype=jnp.bfloat16))   # (D_in, D_out)

    params = jnp.zeros((8, Dp), dtype=jnp.float32)
    params = params.at[0, :D].set(g1.astype(jnp.float32))
    params = params.at[1, :D].set(g2.astype(jnp.float32))
    params = params.at[2, :D].set((be1 + be2).astype(jnp.float32))
    return wT, params


# ---------------------------------------------------------------------------
# Wrapper
# ---------------------------------------------------------------------------
def context_gating_reasoning(x, x1, wT, params):
    """x, x1: (B, D) float32.  wT: (D_pad, D_pad) bf16, params: (8, D_pad) f32
    (both from prepare_params)."""
    B, D = x.shape
    Dp = wT.shape[0]
    if Dp != D:
        pad = ((0, 0), (0, Dp - D))
        x = jnp.pad(x, pad)
        x1 = jnp.pad(x1, pad)
    # Matmul-LHS cast hoisted out of the grid loop (one cast per call, not per tile).
    x_bf16 = x.astype(jnp.bfloat16)
    # TODO(synk): B not a multiple of 8 wastes sublanes; not padded here because
    # zero-row padding would perturb the BatchNorm batch statistics.

    tn = _pick_tile(B, Dp)
    grid = (Dp // tn,)

    in_specs = [
        pl.BlockSpec((B, Dp), lambda j: (0, 0)),    # x (f32): resident, gate slices
        pl.BlockSpec((B, Dp), lambda j: (0, 0)),    # x (bf16): resident, matmul LHS
        pl.BlockSpec((B, tn), lambda j: (0, j)),    # x1 tile
        pl.BlockSpec((Dp, tn), lambda j: (0, j)),   # wT tile (bf16)
        pl.BlockSpec((8, tn), lambda j: (0, j)),    # packed BN params
    ]
    out_spec = pl.BlockSpec((B, tn), lambda j: (0, j))

    out = pl.pallas_call(
        _cgr_kernel,
        out_shape=jax.ShapeDtypeStruct((B, Dp), x.dtype),
        grid=grid,
        in_specs=in_specs,
        out_specs=out_spec,
        compiler_params=pltpu.CompilerParams(
            dimension_semantics=("parallel",),
            vmem_limit_bytes=_vmem_limit_bytes(B, Dp, tn),
        ),
    )(x, x_bf16, x1, wT, params)

    return out[:, :D] if Dp != D else out


# ---------------------------------------------------------------------------
# Reference + test
# ---------------------------------------------------------------------------
def _reference(x, x1, w, b, g1, be1, g2, be2):
    # Faithful f32 reference (keeps the Linear bias; training-mode BN cancels it).
    x2 = x @ w.T + b

    def bn(v, gamma, beta):
        mu = jnp.mean(v, axis=0, keepdims=True)
        var = jnp.mean((v - mu) ** 2, axis=0, keepdims=True)
        return (v - mu) / jnp.sqrt(var + _EPS) * gamma + beta

    t = bn(x1, g1, be1) + bn(x2, g2, be2)
    return x * jax.nn.sigmoid(t)


if __name__ == "__main__":
    B, D = 8, 128   # batch, dimension (nn.Linear in/out features)

    key = jax.random.PRNGKey(0)
    kx, kx1, kw, kb, kg1, kbe1, kg2, kbe2 = jax.random.split(key, 8)

    x  = jax.random.normal(kx,  (B, D), dtype=jnp.float32)
    x1 = jax.random.normal(kx1, (B, D), dtype=jnp.float32)

    # deterministic synthetic parameters (shapes from the module's __init__)
    w   = jax.random.normal(kw, (D, D), dtype=jnp.float32) * (1.0 / jnp.sqrt(D))
    b   = jax.random.normal(kb, (D,), dtype=jnp.float32) * 0.1
    g1  = 1.0 + 0.1 * jax.random.normal(kg1,  (D,), dtype=jnp.float32)
    be1 = 0.1 * jax.random.normal(kbe1, (D,), dtype=jnp.float32)
    g2  = 1.0 + 0.1 * jax.random.normal(kg2,  (D,), dtype=jnp.float32)
    be2 = 0.1 * jax.random.normal(kbe2, (D,), dtype=jnp.float32)

    # One-time parameter prep (transpose, pad, bf16 cast, param packing).
    wT, params = prepare_params(w, b, g1, be1, g2, be2)

    out = context_gating_reasoning(x, x1, wT, params)
    out = jax.block_until_ready(out)

    ref = _reference(x, x1, w, b, g1, be1, g2, be2)
    assert out.shape == (B, D)
    # bf16 matmul operands (BN renormalizes x2, so the impact stays small);
    # the GLU gate itself is exact f32.
    assert jnp.allclose(out, ref, atol=1e-2, rtol=1e-2), "mismatch vs reference"

    print("KERNEL_OK")
</pallas_src>

<mosaic_0001>
module attributes {stable_mosaic.version = 11 : i64} {
  func.func @_cgr_kernel(%arg0: i32, %arg1: memref<8x128xf32, #tpu.memory_space<vmem>>, %arg2: memref<8x128xbf16, #tpu.memory_space<vmem>>, %arg3: memref<8x128xf32, #tpu.memory_space<vmem>>, %arg4: memref<128x128xbf16, #tpu.memory_space<vmem>>, %arg5: memref<8x128xf32, #tpu.memory_space<vmem>>, %arg6: memref<8x128xf32, #tpu.memory_space<vmem>>) attributes {dimension_semantics = [#tpu.dimension_semantics<parallel>], iteration_bounds = array<i64: 1>, scalar_prefetch = 0 : i64, scratch_operands = 0 : i64, tpu.core_type = #tpu.core_type<tc>, window_params = [{pipeline_mode = #tpu.pipeline_mode<synchronous>, transform_indices = @transform_0, window_bounds = array<i64: 8, 128>}, {pipeline_mode = #tpu.pipeline_mode<synchronous>, transform_indices = @transform_1, window_bounds = array<i64: 8, 128>}, {transform_indices = @transform_2, window_bounds = array<i64: 8, 128>}, {transform_indices = @transform_3, window_bounds = array<i64: 128, 128>}, {transform_indices = @transform_4, window_bounds = array<i64: 8, 128>}, {transform_indices = @transform_5, window_bounds = array<i64: 8, 128>}]} {
    %c128_i32 = arith.constant 128 : i32
    %0 = arith.muli %arg0, %c128_i32 : i32
    %1 = tpu.assume_multiple %0, 128 : i32
    %c0 = arith.constant 0 : index
    %c0_0 = arith.constant 0 : index
    %2 = vector.load %arg2[%c0, %c0_0] : memref<8x128xbf16, #tpu.memory_space<vmem>>, vector<8x128xbf16>
    %c0_1 = arith.constant 0 : index
    %c0_2 = arith.constant 0 : index
    %3 = vector.load %arg4[%c0_1, %c0_2] : memref<128x128xbf16, #tpu.memory_space<vmem>>, vector<128x128xbf16>
    %cst = arith.constant dense<0.000000e+00> : vector<8x128xf32>
    %4 = tpu.matmul %2, %3, %cst {dimension_numbers = #tpu.dot_dimension_numbers<[1], [0], [0], [1], [0, 0, 1, 1], [], []>} : vector<8x128xbf16>, vector<128x128xbf16>, vector<8x128xf32> -> vector<8x128xf32>
    %c0_3 = arith.constant 0 : index
    %c0_4 = arith.constant 0 : index
    %5 = vector.load %arg3[%c0_3, %c0_4] : memref<8x128xf32, #tpu.memory_space<vmem>>, vector<8x128xf32>
    %cst_5 = arith.constant dense<0.000000e+00> : vector<128xf32>
    %6 = vector.multi_reduction <add>, %5, %cst_5 [0] : vector<8x128xf32> to vector<128xf32>
    %7 = vector.shape_cast %6 : vector<128xf32> to vector<1x128xf32>
    %cst_6 = arith.constant 8.000000e+00 : f32
    %8 = vector.broadcast %cst_6 : f32 to vector<1x128xf32>
    %9 = arith.divf %7, %8 : vector<1x128xf32>
    %10 = vector.broadcast %9 : vector<1x128xf32> to vector<8x128xf32>
    %11 = arith.subf %5, %10 : vector<8x128xf32>
    %12 = arith.mulf %11, %11 : vector<8x128xf32>
    %cst_7 = arith.constant dense<0.000000e+00> : vector<128xf32>
    %13 = vector.multi_reduction <add>, %12, %cst_7 [0] : vector<8x128xf32> to vector<128xf32>
    %14 = vector.shape_cast %13 : vector<128xf32> to vector<1x128xf32>
    %cst_8 = arith.constant 8.000000e+00 : f32
    %15 = vector.broadcast %cst_8 : f32 to vector<1x128xf32>
    %16 = arith.divf %14, %15 : vector<1x128xf32>
    %cst_9 = arith.constant dense<0.000000e+00> : vector<128xf32>
    %17 = vector.multi_reduction <add>, %4, %cst_9 [0] : vector<8x128xf32> to vector<128xf32>
    %18 = vector.shape_cast %17 : vector<128xf32> to vector<1x128xf32>
    %cst_10 = arith.constant 8.000000e+00 : f32
    %19 = vector.broadcast %cst_10 : f32 to vector<1x128xf32>
    %20 = arith.divf %18, %19 : vector<1x128xf32>
    %21 = vector.broadcast %20 : vector<1x128xf32> to vector<8x128xf32>
    %22 = arith.subf %4, %21 : vector<8x128xf32>
    %23 = arith.mulf %22, %22 : vector<8x128xf32>
    %cst_11 = arith.constant dense<0.000000e+00> : vector<128xf32>
    %24 = vector.multi_reduction <add>, %23, %cst_11 [0] : vector<8x128xf32> to vector<128xf32>
    %25 = vector.shape_cast %24 : vector<128xf32> to vector<1x128xf32>
    %cst_12 = arith.constant 8.000000e+00 : f32
    %26 = vector.broadcast %cst_12 : f32 to vector<1x128xf32>
    %27 = arith.divf %25, %26 : vector<1x128xf32>
    %c0_13 = arith.constant 0 : index
    %c0_14 = arith.constant 0 : index
    %28 = vector.load %arg5[%c0_13, %c0_14] : memref<8x128xf32, #tpu.memory_space<vmem>>, vector<1x128xf32>
    %cst_15 = arith.constant 9.99999974E-6 : f32
    %29 = vector.broadcast %cst_15 : f32 to vector<1x128xf32>
    %30 = arith.addf %16, %29 : vector<1x128xf32>
    %31 = math.rsqrt %30 : vector<1x128xf32>
    %32 = arith.mulf %28, %31 : vector<1x128xf32>
    %c1 = arith.constant 1 : index
    %c0_16 = arith.constant 0 : index
    %33 = vector.load %arg5[%c1, %c0_16] : memref<8x128xf32, #tpu.memory_space<vmem>>, vector<1x128xf32>
    %cst_17 = arith.constant 9.99999974E-6 : f32
    %34 = vector.broadcast %cst_17 : f32 to vector<1x128xf32>
    %35 = arith.addf %27, %34 : vector<1x128xf32>
    %36 = math.rsqrt %35 : vector<1x128xf32>
    %37 = arith.mulf %33, %36 : vector<1x128xf32>
    %38 = vector.broadcast %32 : vector<1x128xf32> to vector<8x128xf32>
    %39 = arith.mulf %11, %38 : vector<8x128xf32>
    %40 = vector.broadcast %37 : vector<1x128xf32> to vector<8x128xf32>
    %41 = arith.mulf %22, %40 : vector<8x128xf32>
    %42 = arith.addf %39, %41 : vector<8x128xf32>
    %c2 = arith.constant 2 : index
    %c0_18 = arith.constant 0 : index
    %43 = vector.load %arg5[%c2, %c0_18] : memref<8x128xf32, #tpu.memory_space<vmem>>, vector<1x128xf32>
    %44 = vector.broadcast %43 : vector<1x128xf32> to vector<8x128xf32>
    %45 = arith.addf %42, %44 : vector<8x128xf32>
    %c0_19 = arith.constant 0 : index
    %46 = arith.index_cast %1 : i32 to index
    %47 = vector.load %arg1[%c0_19, %46] : memref<8x128xf32, #tpu.memory_space<vmem>>, vector<8x128xf32>
    %48 = arith.negf %45 : vector<8x128xf32>
    %49 = math.exp %48 : vector<8x128xf32>
    %cst_20 = arith.constant 1.000000e+00 : f32
    %50 = vector.broadcast %cst_20 : f32 to vector<8x128xf32>
    %51 = arith.addf %50, %49 : vector<8x128xf32>
    %52 = arith.divf %50, %51 : vector<8x128xf32>
    %53 = arith.mulf %47, %52 : vector<8x128xf32>
    %c0_21 = arith.constant 0 : index
    %c0_22 = arith.constant 0 : index
    %54 = vector.load %arg6[%c0_21, %c0_22] : memref<8x128xf32, #tpu.memory_space<vmem>>, vector<8x128xf32>
    tpu.vector_store %arg6[%c0_21, %c0_22], %53 {strides = array<i32>} : memref<8x128xf32, #tpu.memory_space<vmem>>, vector<8x128xf32>,
    return
  }
  func.func @transform_0(%arg0: i32) -> (i32, i32) {
    %c0_i32 = arith.constant 0 : i32
    %c0_i32_0 = arith.constant 0 : i32
    %c0_i32_1 = arith.constant 0 : i32
    return %c0_i32, %c0_i32_0 : i32, i32
  }
  func.func @transform_1(%arg0: i32) -> (i32, i32) {
    %c0_i32 = arith.constant 0 : i32
    %c0_i32_0 = arith.constant 0 : i32
    %c0_i32_1 = arith.constant 0 : i32
    return %c0_i32, %c0_i32_0 : i32, i32
  }
  func.func @transform_2(%arg0: i32) -> (i32, i32) {
    %c0_i32 = arith.constant 0 : i32
    %c0_i32_0 = arith.constant 0 : i32
    return %c0_i32, %arg0 : i32, i32
  }
  func.func @transform_3(%arg0: i32) -> (i32, i32) {
    %c0_i32 = arith.constant 0 : i32
    %c0_i32_0 = arith.constant 0 : i32
    return %c0_i32, %arg0 : i32, i32
  }
  func.func @transform_4(%arg0: i32) -> (i32, i32) {
    %c0_i32 = arith.constant 0 : i32
    %c0_i32_0 = arith.constant 0 : i32
    return %c0_i32, %arg0 : i32, i32
  }
  func.func @transform_5(%arg0: i32) -> (i32, i32) {
    %c0_i32 = arith.constant 0 : i32
    %c0_i32_0 = arith.constant 0 : i32
    return %c0_i32, %arg0 : i32, i32
  }
}

</mosaic_0001>

<llo_original>
// kernel: tpu_custom_call.1
$region0: #{tpu_custom_call.1}
  #allocation0 [shape = 'u32[]', space=smem, size = 0x4, offset = 0x4, fixed_abs, tag = 'smem constant byte address 0x4 - core index']
  #allocation1 [shape = 'u32[144,128]{1,0:T(1,128)}', space=vmem, size = 0x12000, scoped, tag = 'internal scratch']
  %s0 = inlined_call_operand.hbm [shape: f32[8,128], index: 0, kind: input, shape index: {}]
  %s1 = inlined_call_operand.hbm [shape: bf16[8,128], index: 1, kind: input, shape index: {}]
  %s2 = inlined_call_operand.hbm [shape: f32[8,128], index: 2, kind: input, shape index: {}]
  %s3 = inlined_call_operand.hbm [shape: bf16[128,128], index: 3, kind: input, shape index: {}]
  %s4 = inlined_call_operand.vmem [shape: f32[8,128], index: 4, kind: input, shape index: {}]
  %s5 = inlined_call_operand.hbm [shape: f32[8,128], index: 5, kind: output, shape index: {}]
  %s6 = sld [smem:[#allocation0]]
  $region46: #{tpu_custom_call.1} parent=0
    _
  %s8 = ssub.s32 1, %s6
  %s9 = scalar_select 0, %s8, %s6
  $region1: #{tpu_custom_call.1} parent=0
    #allocation2 [shape = 'u8[4096]{0}', space=vmem, size = 0x1000, scoped, tag = 'input window, operand 0, single buffered']
    #allocation3 [shape = 's32[1]{0}', space=sflag, size = 0x4, scoped, tag = 'scoped memory for tpu_custom_call.1']
    #allocation4 [shape = 's32[1]{0}', space=sflag, size = 0x4, scoped, tag = 'scoped memory for tpu_custom_call.1']
    #allocation5 [shape = 'u8[2048]{0}', space=vmem, size = 0x800, scoped, tag = 'input window, operand 1, single buffered']
    #allocation6 [shape = 's32[1]{0}', space=sflag, size = 0x4, scoped, tag = 'scoped memory for tpu_custom_call.1']
    #allocation7 [shape = 'u8[4096]{0}', space=vmem, size = 0x1000, scoped, tag = 'input window, operand 2, single buffered']
    #allocation8 [shape = 'u8[32768]{0}', space=vmem, size = 0x8000, scoped, tag = 'input window, operand 3, single buffered']
    #allocation9 [shape = 's32[1]{0}', space=sflag, size = 0x4, scoped, tag = 'scoped memory for tpu_custom_call.1']
    #allocation10 [shape = 'u8[4096]{0}', space=vmem, size = 0x1000, scoped, tag = 'output window, operand 0, single buffered']
    %10 = vsyncpa [#allocation3], 0
    %11 = vsyncpa [#allocation6], 0
    %12 = vsyncpa [#allocation9], 0
    %13 = vsyncpa [#allocation4], 0
    // Predicated region
    $region2: #{tpu_custom_call.1} parent=1 // pred_check
      _
    $region3: #{tpu_custom_call.1} parent=1 // pred_check_branch
      %15 = sbr.rel (0) target = $region5
    $region4: #{tpu_custom_call.1} parent=1 // pred_region
      %s17 = ssub.s32 128, 128
      %18 = vsyncadd [#allocation3], %s17
      %s20 = sshll.u32 [#allocation2], 4
      %s21 = int_to_ptr.vmem [resolvable:$true] %s20
      %23 = dma.hbm_to_vmem [thread:$0]  %s0, 128, %s21, [#allocation3]
    $region5: #{tpu_custom_call.1} parent=1 // pred_fallthru
      _
    // Predicated region
    $region6: #{tpu_custom_call.1} parent=1 // pred_check
      _
    $region7: #{tpu_custom_call.1} parent=1 // pred_check_branch
      %25 = sbr.rel (0) target = $region9
    $region8: #{tpu_custom_call.1} parent=1 // pred_region
      %s27 = ssub.s32 64, 64
      %28 = vsyncadd [#allocation6], %s27
      %s30 = sshll.u32 [#allocation5], 4
      %s31 = int_to_ptr.vmem [resolvable:$true] %s30
      %33 = dma.hbm_to_vmem [thread:$0]  %s1, 64, %s31, [#allocation6]
    $region9: #{tpu_custom_call.1} parent=1 // pred_fallthru
      _
    // Predicated region
    $region10: #{tpu_custom_call.1} parent=1 // pred_check
      _
    $region11: #{tpu_custom_call.1} parent=1 // pred_check_branch
      %35 = sbr.rel (0) target = $region13
    $region12: #{tpu_custom_call.1} parent=1 // pred_region
      %s37 = ssub.s32 128, 128
      %38 = vsyncadd [#allocation6], %s37
      %s40 = sshll.u32 [#allocation7], 4
      %s41 = int_to_ptr.vmem [resolvable:$true] %s40
      %43 = dma.hbm_to_vmem [thread:$0]  %s2, 128, %s41, [#allocation6]
    $region13: #{tpu_custom_call.1} parent=1 // pred_fallthru
      _
    // Predicated region
    $region14: #{tpu_custom_call.1} parent=1 // pred_check
      _
    $region15: #{tpu_custom_call.1} parent=1 // pred_check_branch
      %45 = sbr.rel (0) target = $region17
    $region16: #{tpu_custom_call.1} parent=1 // pred_region
      %s47 = ssub.s32 1024, 1024
      %48 = vsyncadd [#allocation9], %s47
      %s49 = sshll.u32 [#allocation8], 4
      %s50 = int_to_ptr.vmem [resolvable:$true] %s49
      %55 = dma.hbm_to_vmem [thread:$0]  %s3, 1024, %s50, [#allocation9], 64, 64, 4
    $region17: #{tpu_custom_call.1} parent=1 // pred_fallthru
      _
    // Predicated region
    $region18: #{tpu_custom_call.1} parent=1 // pred_check
      _
    $region19: #{tpu_custom_call.1} parent=1 // pred_check_branch
      %57 = sbr.rel (0) target = $region21
    $region20: #{tpu_custom_call.1} parent=1 // pred_region
      _
    $region21: #{tpu_custom_call.1} parent=1 // pred_fallthru
      _
    // Predicated region
    $region22: #{tpu_custom_call.1} parent=1 // pred_check
      _
    $region23: #{tpu_custom_call.1} parent=1 // pred_check_branch
      %59 = sbr.rel (0) target = $region25
    $region24: #{tpu_custom_call.1} parent=1 // pred_region
      %60 = dma.done [#allocation3], 128
    $region25: #{tpu_custom_call.1} parent=1 // pred_fallthru
      _
    // Predicated region
    $region26: #{tpu_custom_call.1} parent=1 // pred_check
      _
    $region27: #{tpu_custom_call.1} parent=1 // pred_check_branch
      %62 = sbr.rel (0) target = $region29
    $region28: #{tpu_custom_call.1} parent=1 // pred_region
      %63 = dma.done [#allocation6], 64
    $region29: #{tpu_custom_call.1} parent=1 // pred_fallthru
      _
    // Predicated region
    $region30: #{tpu_custom_call.1} parent=1 // pred_check
      _
    $region31: #{tpu_custom_call.1} parent=1 // pred_check_branch
      %65 = sbr.rel (0) target = $region33
    $region32: #{tpu_custom_call.1} parent=1 // pred_region
      %66 = dma.done [#allocation6], 128
    $region33: #{tpu_custom_call.1} parent=1 // pred_fallthru
      _
    // Predicated region
    $region34: #{tpu_custom_call.1} parent=1 // pred_check
      _
    $region35: #{tpu_custom_call.1} parent=1 // pred_check_branch
      %68 = sbr.rel (0) target = $region37
    $region36: #{tpu_custom_call.1} parent=1 // pred_region
      %69 = dma.done [#allocation9], 1024
    $region37: #{tpu_custom_call.1} parent=1 // pred_fallthru
      _
    %s71 = smul.u32 0, 128
    %v72 = vld [vmem:[#allocation5] sm:$0xf]
    %v73 = vld [vmem:[#allocation8] sm:$0xf]
    %v74 = vld [vmem:[#allocation8 + $0x4] sm:$0xf]
    %v75 = vld [vmem:[#allocation8 + $0x8] sm:$0xf]
    %v76 = vld [vmem:[#allocation8 + $0xc] sm:$0xf]
    %v77 = vld [vmem:[#allocation8 + $0x10] sm:$0xf]
    %v78 = vld [vmem:[#allocation8 + $0x14] sm:$0xf]
    %v79 = vld [vmem:[#allocation8 + $0x18] sm:$0xf]
    %v80 = vld [vmem:[#allocation8 + $0x1c] sm:$0xf]
    %v81 = vld [vmem:[#allocation8 + $0x20] sm:$0xf]
    %v82 = vld [vmem:[#allocation8 + $0x24] sm:$0xf]
    %v83 = vld [vmem:[#allocation8 + $0x28] sm:$0xf]
    %v84 = vld [vmem:[#allocation8 + $0x2c] sm:$0xf]
    %v85 = vld [vmem:[#allocation8 + $0x30] sm:$0xf]
    %v86 = vld [vmem:[#allocation8 + $0x34] sm:$0xf]
    %v87 = vld [vmem:[#allocation8 + $0x38] sm:$0xf]
    %v88 = vld [vmem:[#allocation8 + $0x3c] sm:$0xf]
    %v105 = vunpack.c.l.b16 %v73
    %v106 = vunpack.c.l.b16 %v74
    %v107 = vunpack.c.l.b16 %v75
    %v108 = vunpack.c.l.b16 %v76
    %v109 = vunpack.c.l.b16 %v77
    %v110 = vunpack.c.l.b16 %v78
    %v111 = vunpack.c.l.b16 %v79
    %v112 = vunpack.c.l.b16 %v80
    %v113 = vunpack.c.l.b16 %v81
    %v114 = vunpack.c.l.b16 %v82
    %v115 = vunpack.c.l.b16 %v83
    %v116 = vunpack.c.l.b16 %v84
    %v117 = vunpack.c.l.b16 %v85
    %v118 = vunpack.c.l.b16 %v86
    %v119 = vunpack.c.l.b16 %v87
    %v120 = vunpack.c.l.b16 %v88
    %v121 = vpack.c.b16 %v106, %v105
    %v122 = vpack.c.b16 %v108, %v107
    %v123 = vpack.c.b16 %v110, %v109
    %v124 = vpack.c.b16 %v112, %v111
    %v125 = vpack.c.b16 %v114, %v113
    %v126 = vpack.c.b16 %v116, %v115
    %v127 = vpack.c.b16 %v118, %v117
    %v128 = vpack.c.b16 %v120, %v119
    %137 = vmatprep.subr.bf16.mxu0 0
    %138 = vmatpush1.bf16.msra.mxu0 %v121
    %139 = vmatprep.subr.bf16.mxu0 0
    %140 = vmatpush1.bf16.msra.mxu0 %v122
    %141 = vmatprep.subr.bf16.mxu0 0
    %142 = vmatpush1.bf16.msra.mxu0 %v123
    %143 = vmatprep.subr.bf16.mxu0 0
    %144 = vmatpush1.bf16.msra.mxu0 %v124
    %145 = vmatprep.subr.bf16.mxu0 0
    %146 = vmatpush1.bf16.msra.mxu0 %v125
    %147 = vmatprep.subr.bf16.mxu0 0
    %148 = vmatpush1.bf16.msra.mxu0 %v126
    %149 = vmatprep.subr.bf16.mxu0 0
    %150 = vmatpush1.bf16.msra.mxu0 %v127
    %151 = vmatprep.subr.bf16.mxu0 0
    %152 = vmatpush1.bf16.msra.mxu0 %v128
    %153 = vmatprep.subr.bf16.mxu0 0
    %154 = vmatpush1.bf16.msra.mxu0 0
    %155 = vmatprep.subr.bf16.mxu0 0
    %156 = vmatpush1.bf16.msra.mxu0 0
    %157 = vmatprep.subr.bf16.mxu0 0
    %158 = vmatpush1.bf16.msra.mxu0 0
    %159 = vmatprep.subr.bf16.mxu0 0
    %160 = vmatpush1.bf16.msra.mxu0 0
    %161 = vmatprep.subr.bf16.mxu0 0
    %162 = vmatpush1.bf16.msra.mxu0 0
    %163 = vmatprep.subr.bf16.mxu0 0
    %164 = vmatpush1.bf16.msra.mxu0 0
    %165 = vmatprep.subr.bf16.mxu0 0
    %166 = vmatpush1.bf16.msra.mxu0 0
    %167 = vmatprep.subr.bf16.mxu0 0
    %168 = vmatpush1.bf16.msra.mxu0 0
    %169 = vmatprep.mubr.bf16.mxu0 0
    %170 = vmatmul.mubr.bf16.gmra.mrb[0].mxu0 %v72
    %v171 = vpop.f32.mrb[0].mxu0
    %v172 = vadd.f32 0.0, %v171
    %v173 = vpop.f32.mrb[0].mxu0
    %v174 = vpop.f32.mrb[0].mxu0
    %v175 = vpop.f32.mrb[0].mxu0
    %176 = vdwg.mxu0
    %v177 = vld [vmem:[#allocation7] sm:$0xff]
    %v178 = vrot.slane %v177, 4
    %v179 = vadd.f32 %v177, %v178
    %v180 = vrot.slane %v179, 2
    %v181 = vadd.f32 %v179, %v180
    %v182 = vrot.slane %v181, 1
    %v183 = vadd.f32 %v181, %v182
    %v184 = vrcp.pop 8.0
    %v185 = vmul.f32 %v183, %v184
    %v186 = vsub.f32 %v177, %v185
    %v187 = vmul.f32 %v186, %v186
    %v188 = vrot.slane %v187, 4
    %v189 = vadd.f32 %v187, %v188
    %v190 = vrot.slane %v189, 2
    %v191 = vadd.f32 %v189, %v190
    %v192 = vrot.slane %v191, 1
    %v193 = vadd.f32 %v191, %v192
    %v194 = vmul.f32 %v193, %v184
    %v195 = vrot.slane %v172, 4
    %v196 = vadd.f32 %v172, %v195
    %v197 = vrot.slane %v196, 2
    %v198 = vadd.f32 %v196, %v197
    %v199 = vrot.slane %v198, 1
    %v200 = vadd.f32 %v198, %v199
    %v201 = vmul.f32 %v200, %v184
    %v202 = vsub.f32 %v172, %v201
    %v203 = vmul.f32 %v202, %v202
    %v204 = vrot.slane %v203, 4
    %v205 = vadd.f32 %v203, %v204
    %v206 = vrot.slane %v205, 2
    %v207 = vadd.f32 %v205, %v206
    %v208 = vrot.slane %v207, 1
    %v209 = vadd.f32 %v207, %v208
    %v210 = vmul.f32 %v209, %v184
    %v211 = vld [vmem:[%s4] sm:$0x1]
    %v212 = vadd.f32 %v194, 1e-05
    %v213 = vrsqrt.pop %v212
    %v214 = vmul.f32 %v211, %v213
    %v215 = vld [vmem:[%s4 + $0x1] sm:$0x1]
    %v216 = vadd.f32 %v210, 1e-05
    %v217 = vrsqrt.pop %v216
    %v218 = vmul.f32 %v215, %v217
    %v219 = vlaneseq
    %v220 = vshrl.u32 %v219, 7
    %v221 = vsub.s32 0, %v220
    %v222 = vrot.slane %v214, %v221
    %v223 = vmul.f32 %v186, %v222
    %v224 = vlaneseq
    %v225 = vshrl.u32 %v224, 7
    %v226 = vsub.s32 0, %v225
    %v227 = vrot.slane %v218, %v226
    %v228 = vmul.f32 %v202, %v227
    %v229 = vadd.f32 %v223, %v228
    %v230 = vld [vmem:[%s4 + $0x2] sm:$0x1]
    %v231 = vlaneseq
    %v232 = vshrl.u32 %v231, 7
    %v233 = vsub.s32 0, %v232
    %v234 = vrot.slane %v230, %v233
    %v235 = vadd.f32 %v229, %v234
    %s236 = sshra.s32 %s71, 7
    %s237 = sand.u32 %s71, 127
    %s238 = scalar_lea.vmem [#allocation2], %s236
    %v239 = vld [vmem:[%s238] sm:$0xff]
    %v240 = vxor.u32 %v235, 2147483648
    %v241 = vmul.f32 %v240, 1.442695
    %v242 = vpow.pop %v241
    %v243 = vadd.f32 %v242, 1.0
    %v244 = vrcp.pop %v243
    %v245 = vmul.f32 1.0, %v244
    %v246 = vmul.f32 %v239, %v245
    %247 = vst [vmem:[#allocation10] sm:$0xff] %v246
    // Predicated region
    $region38: #{tpu_custom_call.1} parent=1 // pred_check
      _
    $region39: #{tpu_custom_call.1} parent=1 // pred_check_branch
      %249 = sbr.rel (0) target = $region41
    $region40: #{tpu_custom_call.1} parent=1 // pred_region
      %s251 = ssub.s32 128, 128
      %252 = vsyncadd [#allocation4], %s251
      %s254 = sshll.u32 [#allocation10], 4
      %s255 = int_to_ptr.vmem [resolvable:$true] %s254
      %257 = dma.vmem_to_hbm [thread:$0]  %s255, 128, %s5, [#allocation4]
    $region41: #{tpu_custom_call.1} parent=1 // pred_fallthru
      _
    // Predicated region
    $region42: #{tpu_custom_call.1} parent=1 // pred_check
      _
    $region43: #{tpu_custom_call.1} parent=1 // pred_check_branch
      %259 = sbr.rel (0) target = $region45
    $region44: #{tpu_custom_call.1} parent=1 // pred_region
      %260 = dma.done [#allocation4], 128
    $region45: #{tpu_custom_call.1} parent=1 // pred_fallthru
      _
    %261 = vsyncpa [#allocation3], 1
    %262 = vsyncpa [#allocation6], 1
    %263 = vsyncpa [#allocation9], 1
    %264 = vsyncpa [#allocation4], 1

</llo_original>
